<compile_context>
chip_gen: v6e
topology: v6e:2x2x1
jax: 0.10.0
libtpu: 0.0.40
codegen_flags: <defaults>
</compile_context>

<pallas_src>
import functools

import jax
import jax.numpy as jnp
from jax import lax
from jax.experimental import pallas as pl
from jax.experimental.pallas import tpu as pltpu


def _cnn1_1lin_kernel(frames_ref, w_ref, b_ref, out_ref, acc_ref, *, t_blk, ts):
    """Grid = (batch_blocks [parallel], time_blocks [arbitrary]).

    frames_ref: (b_blk, t_blk, C*H*W) f32  -- flattened raw frames
    w_ref:      (C*H*W, N_pad)        f32  -- conv folded into fc (1/ts included)
    b_ref:      (1, N_pad)            f32  -- effective bias (1/ts included)
    out_ref:    (b_blk, N_pad)        f32
    acc_ref:    (b_blk, C*H*W)        f32  -- running frame sum (VMEM scratch)
    """
    ti = pl.program_id(1)
    n_tb = pl.num_programs(1)

    @pl.when(ti == 0)
    def _():
        acc_ref[...] = jnp.zeros_like(acc_ref)

    # Global frame indices covered by this time block.  Frame 0 is skipped
    # (torch loops ii in range(1, ts)); indices >= ts mask any ragged tail.
    idx = ti * t_blk + lax.broadcasted_iota(jnp.int32, (1, t_blk, 1), 1)
    valid = (idx >= 1) & (idx < ts)
    frames = frames_ref[...]                                   # (b_blk, t_blk, CHW)
    acc_ref[...] += jnp.where(valid, frames, 0.0).sum(axis=1)  # lane-dense VPU add

    @pl.when(ti == n_tb - 1)
    def _():
        out_ref[...] = (
            jnp.dot(acc_ref[...], w_ref[...], preferred_element_type=jnp.float32)
            + b_ref[...]
        )


def _fold_conv_into_fc(conv_w, conv_b, fc_w, fc_b, c, h, w, ts):
    """Fold 3x3 same-conv (1 out channel) + flatten + fc + (1/ts) into one affine map.

    W_eff[c*H*W + i*W + j, n] = (1/ts) * sum_{kh,kw} conv_w[0,c,kh,kw] *
                                 fc_w[n, (i-kh+1)*W + (j-kw+1)]   (OOB taps -> 0)
    b_eff[n] = ((ts-1)/ts) * (conv_b * sum_pq fc_w[n,pq] + fc_b[n])
    """
    n = fc_w.shape[0]
    fc_img = fc_w.astype(jnp.float32).T.reshape(h, w, n)        # (H, W, N)
    fc_pad = jnp.pad(fc_img, ((1, 1), (1, 1), (0, 0)))          # zero pad == omitted taps
    w_eff = jnp.zeros((c, h, w, n), jnp.float32)
    for kh in range(3):
        for kw in range(3):
            tap = conv_w[0, :, kh, kw].astype(jnp.float32)      # (C,)
            shifted = fc_pad[2 - kh:2 - kh + h, 2 - kw:2 - kw + w, :]
            w_eff = w_eff + tap[:, None, None, None] * shifted[None]
    w_eff = w_eff.reshape(c * h * w, n) / ts
    nt = ts - 1
    b_eff = (nt / ts) * (
        conv_b[0] * fc_w.astype(jnp.float32).sum(axis=1) + fc_b.astype(jnp.float32)
    )
    return w_eff, b_eff


def _pick_batch_block(b):
    if b <= 8:
        return b
    for cand in (128, 64, 32, 16, 8):
        if b % cand == 0:
            return cand
    return b


def _pick_time_block(ts, bytes_per_frame_row, budget=2 << 20):
    """Biggest time block within ~budget bytes; multiple of 8 unless it covers TS."""
    t_cap = max(1, budget // max(1, bytes_per_frame_row))
    if ts <= 8 or ts <= t_cap:
        return ts
    return max(8, (min(t_cap, ts) // 8) * 8)


def cnn1_1lin_forward(x, conv_w, conv_b, fc_w, fc_b):
    """x: (B, TS, C, H, W) f32.  conv_w: (1, C, 3, 3), conv_b: (1,),
    fc_w: (NUM_CLASSES, H*W) (PyTorch Linear layout), fc_b: (NUM_CLASSES,)."""
    b, ts, c, h, w = x.shape
    n = fc_w.shape[0]
    if ts <= 1:
        # torch: `for ii in range(1, ts)` never runs -> zeros / ts == zeros
        return jnp.zeros((b, n), jnp.float32)

    chw = c * h * w
    n_pad = ((n + 127) // 128) * 128                      # lane-dense output width

    w_eff, b_eff = _fold_conv_into_fc(conv_w, conv_b, fc_w, fc_b, c, h, w, ts)
    w_eff = jnp.pad(w_eff, ((0, 0), (0, n_pad - n)))      # (CHW, N_pad)
    b_eff = jnp.pad(b_eff, (0, n_pad - n)).reshape(1, n_pad)

    # Free, contiguous reshape: no transpose, no spatial padding, no frame-0 slice.
    frames = x.reshape(b, ts, chw).astype(jnp.float32)

    b_blk = _pick_batch_block(b)
    t_blk = _pick_time_block(ts, b_blk * chw * 4)
    grid = (pl.cdiv(b, b_blk), pl.cdiv(ts, t_blk))

    kernel = functools.partial(_cnn1_1lin_kernel, t_blk=t_blk, ts=ts)

    out = pl.pallas_call(
        kernel,
        out_shape=jax.ShapeDtypeStruct((b, n_pad), jnp.float32),
        grid_spec=pltpu.PrefetchScalarGridSpec(
            num_scalar_prefetch=0,
            grid=grid,
            in_specs=[
                # several frames per grid step (amortizes per-step overhead)
                pl.BlockSpec((b_blk, t_blk, chw), lambda bi, ti: (bi, ti, 0)),
                # folded fc weight / bias resident in VMEM
                pl.BlockSpec((chw, n_pad), lambda bi, ti: (0, 0)),
                pl.BlockSpec((1, n_pad), lambda bi, ti: (0, 0)),
            ],
            out_specs=pl.BlockSpec((b_blk, n_pad), lambda bi, ti: (bi, 0)),
            scratch_shapes=[pltpu.VMEM((b_blk, chw), jnp.float32)],
        ),
        compiler_params=pltpu.CompilerParams(
            dimension_semantics=("parallel", "arbitrary")),  # batch parallel (v7x 2 TCs)
    )(frames, w_eff, b_eff)

    return out[:, :n]


def _reference_forward(x, conv_w, conv_b, fc_w, fc_b):
    """Pure-JAX reference mirroring the PyTorch forward."""
    b, ts, c, h, w = x.shape
    n = fc_w.shape[0]
    out = jnp.zeros((b, n), jnp.float32)
    for ii in range(1, ts):
        frame = x[:, ii]                                          # (B, C, H, W)
        padded = jnp.pad(frame, ((0, 0), (0, 0), (1, 1), (1, 1)))
        conv = jnp.zeros((b, h, w), jnp.float32)
        for cin in range(c):
            for kh in range(3):
                for kw in range(3):
                    conv = conv + conv_w[0, cin, kh, kw] * padded[:, cin, kh:kh + h, kw:kw + w]
        conv = conv + conv_b[0]
        out = out + conv.reshape(b, h * w) @ fc_w.T + fc_b
    return out / ts


if __name__ == "__main__":
    B, TS, C, H, W = 2, 4, 3, 16, 16
    NUM_CLASSES = 10

    key = jax.random.PRNGKey(0)
    k_x, k_cw, k_cb, k_fw, k_fb = jax.random.split(key, 5)
    x = jax.random.normal(k_x, (B, TS, C, H, W), jnp.float32)
    conv_w = jax.random.normal(k_cw, (1, C, 3, 3), jnp.float32) * 0.1
    conv_b = jax.random.normal(k_cb, (1,), jnp.float32) * 0.1
    fc_w = jax.random.normal(k_fw, (NUM_CLASSES, H * W), jnp.float32) * 0.05
    fc_b = jax.random.normal(k_fb, (NUM_CLASSES,), jnp.float32) * 0.05

    out = cnn1_1lin_forward(x, conv_w, conv_b, fc_w, fc_b)
    out = jax.block_until_ready(out)

    ref = _reference_forward(x, conv_w, conv_b, fc_w, fc_b)
    assert out.shape == (B, NUM_CLASSES)
    assert jnp.allclose(out, ref, rtol=1e-4, atol=1e-4), (out, ref)
    print("KERNEL_OK")
</pallas_src>

<mosaic_0001>
module attributes {stable_mosaic.version = 11 : i64} {
  func.func @_cnn1_1lin_kernel(%arg0: i32, %arg1: i32, %arg2: memref<2x4x768xf32, #tpu.memory_space<vmem>>, %arg3: memref<768x128xf32, #tpu.memory_space<vmem>>, %arg4: memref<1x128xf32, #tpu.memory_space<vmem>>, %arg5: memref<2x128xf32, #tpu.memory_space<vmem>>, %arg6: memref<2x768xf32, #tpu.memory_space<vmem>>) attributes {dimension_semantics = [#tpu.dimension_semantics<parallel>, #tpu.dimension_semantics<arbitrary>], iteration_bounds = array<i64: 1, 1>, scalar_prefetch = 0 : i64, scratch_operands = 1 : i64, tpu.core_type = #tpu.core_type<tc>, window_params = [{transform_indices = @transform_0, window_bounds = array<i64: 2, 4, 768>}, {pipeline_mode = #tpu.pipeline_mode<synchronous>, transform_indices = @transform_1, window_bounds = array<i64: 768, 128>}, {pipeline_mode = #tpu.pipeline_mode<synchronous>, transform_indices = @transform_2, window_bounds = array<i64: 1, 128>}, {transform_indices = @transform_3, window_bounds = array<i64: 2, 128>}]} {
    %c0_i32 = arith.constant 0 : i32
    %0 = arith.cmpi eq, %arg1, %c0_i32 : i32
    %1 = arith.extui %0 : i1 to i32
    %c0_i32_0 = arith.constant 0 : i32
    %2 = arith.cmpi ne, %1, %c0_i32_0 : i32
    scf.if %2 {
      %cst_11 = arith.constant 0.000000e+00 : f32
      %24 = vector.broadcast %cst_11 : f32 to vector<2x768xf32>
      %c0_12 = arith.constant 0 : index
      %c0_13 = arith.constant 0 : index
      %25 = vector.load %arg6[%c0_12, %c0_13] : memref<2x768xf32, #tpu.memory_space<vmem>>, vector<2x768xf32>
      tpu.vector_store %arg6[%c0_12, %c0_13], %24 {strides = array<i32>} : memref<2x768xf32, #tpu.memory_space<vmem>>, vector<2x768xf32>,
    } else {
    }
    %c4_i32 = arith.constant 4 : i32
    %3 = arith.muli %arg1, %c4_i32 : i32
    %4 = tpu.iota {dimensions = array<i32: 1>} : vector<1x4x1xi32>
    %5 = vector.broadcast %3 : i32 to vector<1x4x1xi32>
    %6 = arith.addi %5, %4 : vector<1x4x1xi32>
    %c1_i32 = arith.constant 1 : i32
    %7 = vector.broadcast %c1_i32 : i32 to vector<1x4x1xi32>
    %8 = arith.cmpi sge, %6, %7 : vector<1x4x1xi32>
    %c4_i32_1 = arith.constant 4 : i32
    %9 = vector.broadcast %c4_i32_1 : i32 to vector<1x4x1xi32>
    %10 = arith.cmpi slt, %6, %9 : vector<1x4x1xi32>
    %11 = arith.andi %8, %10 : vector<1x4x1xi1>
    %c0 = arith.constant 0 : index
    %c0_2 = arith.constant 0 : index
    %c0_3 = arith.constant 0 : index
    %12 = vector.load %arg2[%c0, %c0_2, %c0_3] : memref<2x4x768xf32, #tpu.memory_space<vmem>>, vector<2x4x768xf32>
    %c0_4 = arith.constant 0 : index
    %c0_5 = arith.constant 0 : index
    %13 = vector.load %arg6[%c0_4, %c0_5] : memref<2x768xf32, #tpu.memory_space<vmem>>, vector<2x768xf32>
    %cst = arith.constant 0.000000e+00 : f32
    %14 = vector.shape_cast %11 : vector<1x4x1xi1> to vector<1x4x1xi1>
    %15 = vector.broadcast %14 : vector<1x4x1xi1> to vector<2x4x768xi1>
    %16 = vector.broadcast %cst : f32 to vector<2x4x768xf32>
    %17 = arith.select %15, %12, %16 : vector<2x4x768xi1>, vector<2x4x768xf32>
    %cst_6 = arith.constant dense<0.000000e+00> : vector<2x768xf32>
    %18 = vector.multi_reduction <add>, %17, %cst_6 [1] : vector<2x4x768xf32> to vector<2x768xf32>
    %19 = arith.addf %13, %18 : vector<2x768xf32>
    %c0_7 = arith.constant 0 : index
    %c0_8 = arith.constant 0 : index
    %20 = vector.load %arg6[%c0_7, %c0_8] : memref<2x768xf32, #tpu.memory_space<vmem>>, vector<2x768xf32>
    tpu.vector_store %arg6[%c0_7, %c0_8], %19 {strides = array<i32>} : memref<2x768xf32, #tpu.memory_space<vmem>>, vector<2x768xf32>,
    %c0_i32_9 = arith.constant 0 : i32
    %21 = arith.cmpi eq, %arg1, %c0_i32_9 : i32
    %22 = arith.extui %21 : i1 to i32
    %c0_i32_10 = arith.constant 0 : i32
    %23 = arith.cmpi ne, %22, %c0_i32_10 : i32
    scf.if %23 {
      %c0_11 = arith.constant 0 : index
      %c0_12 = arith.constant 0 : index
      %24 = vector.load %arg6[%c0_11, %c0_12] : memref<2x768xf32, #tpu.memory_space<vmem>>, vector<2x768xf32>
      %c0_13 = arith.constant 0 : index
      %c0_14 = arith.constant 0 : index
      %25 = vector.load %arg3[%c0_13, %c0_14] : memref<768x128xf32, #tpu.memory_space<vmem>>, vector<768x128xf32>
      %cst_15 = arith.constant dense<0.000000e+00> : vector<2x128xf32>
      %26 = tpu.matmul %24, %25, %cst_15 {dimension_numbers = #tpu.dot_dimension_numbers<[1], [0], [0], [1], [0, 0, 1, 1], [], []>} : vector<2x768xf32>, vector<768x128xf32>, vector<2x128xf32> -> vector<2x128xf32>
      %c0_16 = arith.constant 0 : index
      %c0_17 = arith.constant 0 : index
      %27 = vector.load %arg4[%c0_16, %c0_17] : memref<1x128xf32, #tpu.memory_space<vmem>>, vector<1x128xf32>
      %28 = vector.broadcast %27 : vector<1x128xf32> to vector<2x128xf32>
      %29 = arith.addf %26, %28 : vector<2x128xf32>
      %c0_18 = arith.constant 0 : index
      %c0_19 = arith.constant 0 : index
      %30 = vector.load %arg5[%c0_18, %c0_19] : memref<2x128xf32, #tpu.memory_space<vmem>>, vector<2x128xf32>
      tpu.vector_store %arg5[%c0_18, %c0_19], %29 {strides = array<i32>} : memref<2x128xf32, #tpu.memory_space<vmem>>, vector<2x128xf32>,
    } else {
    }
    return
  }
  func.func @transform_0(%arg0: i32, %arg1: i32) -> (i32, i32, i32) {
    %c0_i32 = arith.constant 0 : i32
    %c0_i32_0 = arith.constant 0 : i32
    return %arg0, %arg1, %c0_i32 : i32, i32, i32
  }
  func.func @transform_1(%arg0: i32, %arg1: i32) -> (i32, i32) {
    %c0_i32 = arith.constant 0 : i32
    %c0_i32_0 = arith.constant 0 : i32
    %c0_i32_1 = arith.constant 0 : i32
    return %c0_i32, %c0_i32_0 : i32, i32
  }
  func.func @transform_2(%arg0: i32, %arg1: i32) -> (i32, i32) {
    %c0_i32 = arith.constant 0 : i32
    %c0_i32_0 = arith.constant 0 : i32
    %c0_i32_1 = arith.constant 0 : i32
    return %c0_i32, %c0_i32_0 : i32, i32
  }
  func.func @transform_3(%arg0: i32, %arg1: i32) -> (i32, i32) {
    %c0_i32 = arith.constant 0 : i32
    %c0_i32_0 = arith.constant 0 : i32
    return %arg0, %c0_i32 : i32, i32
  }
}

</mosaic_0001>

<llo_original>
// kernel: tpu_custom_call.1
$region0: #{tpu_custom_call.1}
  #allocation0 [shape = 'u32[]', space=smem, size = 0x4, offset = 0x4, fixed_abs, tag = 'smem constant byte address 0x4 - core index']
  #allocation1 [shape = 'u32[144,128]{1,0:T(1,128)}', space=vmem, size = 0x12000, scoped, tag = 'internal scratch']
  #allocation2 [shape = 'f32[2,768]{1,0:T(2,128)}', space=vmem, size = 0x1800, scoped, tag = 'scratch operand']
  %s0 = inlined_call_operand.hbm [shape: f32[2,4,768], index: 0, kind: input, shape index: {}]
  %s1 = inlined_call_operand.hbm [shape: f32[768,128], index: 1, kind: input, shape index: {}]
  %s2 = inlined_call_operand.vmem [shape: f32[1,128], index: 2, kind: input, shape index: {}]
  %s3 = inlined_call_operand.hbm [shape: f32[2,128], index: 3, kind: output, shape index: {}]
  %s4 = sld [smem:[#allocation0]]
  $region38: #{tpu_custom_call.1} parent=0
    _
  %s6 = ssub.s32 1, %s4
  %s7 = scalar_select 0, %s6, %s4
  $region1: #{tpu_custom_call.1} parent=0
    #allocation3 [shape = 'u8[24576]{0}', space=vmem, size = 0x6000, scoped, tag = 'input window, operand 0, single buffered']
    #allocation4 [shape = 's32[1]{0}', space=sflag, size = 0x4, scoped, tag = 'scoped memory for tpu_custom_call.1']
    #allocation5 [shape = 's32[1]{0}', space=sflag, size = 0x4, scoped, tag = 'scoped memory for tpu_custom_call.1']
    #allocation6 [shape = 'u8[393216]{0}', space=vmem, size = 0x60000, scoped, tag = 'input window, operand 1, single buffered']
    #allocation7 [shape = 's32[1]{0}', space=sflag, size = 0x4, scoped, tag = 'scoped memory for tpu_custom_call.1']
    #allocation8 [shape = 'u8[1024]{0}', space=vmem, size = 0x400, scoped, tag = 'output window, operand 0, single buffered']
    %8 = vsyncpa [#allocation4], 0
    %9 = vsyncpa [#allocation7], 0
    %10 = vsyncpa [#allocation5], 0
    // Predicated region
    $region2: #{tpu_custom_call.1} parent=1 // pred_check
      _
    $region3: #{tpu_custom_call.1} parent=1 // pred_check_branch
      %12 = sbr.rel (0) target = $region5
    $region4: #{tpu_custom_call.1} parent=1 // pred_region
      %s14 = ssub.s32 768, 768
      %15 = vsyncadd [#allocation4], %s14
      %s16 = sshll.u32 [#allocation3], 4
      %s17 = int_to_ptr.vmem [resolvable:$true] %s16
      %22 = dma.hbm_to_vmem [thread:$0]  %s0, 768, %s17, [#allocation4], 384, 384, 24
    $region5: #{tpu_custom_call.1} parent=1 // pred_fallthru
      _
    // Predicated region
    $region6: #{tpu_custom_call.1} parent=1 // pred_check
      _
    $region7: #{tpu_custom_call.1} parent=1 // pred_check_branch
      %24 = sbr.rel (0) target = $region9
    $region8: #{tpu_custom_call.1} parent=1 // pred_region
      %s26 = ssub.s32 12288, 12288
      %27 = vsyncadd [#allocation7], %s26
      %s28 = sshll.u32 [#allocation6], 4
      %s29 = int_to_ptr.vmem [resolvable:$true] %s28
      %34 = dma.hbm_to_vmem [thread:$0]  %s1, 12288, %s29, [#allocation7], 128, 128, 8
    $region9: #{tpu_custom_call.1} parent=1 // pred_fallthru
      _
    // Predicated region
    $region10: #{tpu_custom_call.1} parent=1 // pred_check
      _
    $region11: #{tpu_custom_call.1} parent=1 // pred_check_branch
      %36 = sbr.rel (0) target = $region13
    $region12: #{tpu_custom_call.1} parent=1 // pred_region
      _
    $region13: #{tpu_custom_call.1} parent=1 // pred_fallthru
      _
    // Predicated region
    $region14: #{tpu_custom_call.1} parent=1 // pred_check
      _
    $region15: #{tpu_custom_call.1} parent=1 // pred_check_branch
      %38 = sbr.rel (0) target = $region17
    $region16: #{tpu_custom_call.1} parent=1 // pred_region
      %39 = dma.done [#allocation4], 768
    $region17: #{tpu_custom_call.1} parent=1 // pred_fallthru
      _
    // Predicated region
    $region18: #{tpu_custom_call.1} parent=1 // pred_check
      _
    $region19: #{tpu_custom_call.1} parent=1 // pred_check_branch
      %41 = sbr.rel (0) target = $region21
    $region20: #{tpu_custom_call.1} parent=1 // pred_region
      %42 = dma.done [#allocation7], 12288
    $region21: #{tpu_custom_call.1} parent=1 // pred_fallthru
      _
    %p43 = scmp.eq.s32.totalorder 0, 0
    // Predicated region
    $region22: #{tpu_custom_call.1} parent=1 // pred_check
      %p44 = pneg %p43
    $region23: #{tpu_custom_call.1} parent=1 // pred_check_branch
      %46 = sbr.rel (%p44) target = $region25
    $region24: #{tpu_custom_call.1} parent=1 // pred_region
      %47 = vst [vmem:[#allocation2] sm:$0xff] 0.0
      %48 = vst [vmem:[#allocation2 + $0x8] sm:$0xf] 0.0
    $region25: #{tpu_custom_call.1} parent=1 // pred_fallthru
      _
    %s49 = smul.u32 0, 4
    %v50 = vlaneseq
    %v51 = vshrl.u32 %v50, 7
    %v52 = vstv %s49
    %v53 = vadd.s32 %v52, %v51
    %vm54 = vcmp.ge.s32.totalorder %v53, 1
    %vm55 = vcmp.lt.s32.totalorder %v53, 4
    %vm56 = vmand %vm54, %vm55
    %v57 = vld [vmem:[#allocation3] sm:$0xff]
    %v58 = vld [vmem:[#allocation3 + $0x8] sm:$0xff]
    %v59 = vld [vmem:[#allocation3 + $0x10] sm:$0xff]
    %v60 = vld [vmem:[#allocation3 + $0x18] sm:$0xff]
    %v61 = vld [vmem:[#allocation3 + $0x20] sm:$0xff]
    %v62 = vld [vmem:[#allocation3 + $0x28] sm:$0xff]
    %v63 = vld [vmem:[#allocation2] sm:$0xff]
    %v64 = vld [vmem:[#allocation2 + $0x8] sm:$0xf]
    %v65 = vsel %vm56, 1, 0
    %vm66 = vcmp.eq.s32.totalorder %v65, 1
    %v73 = vcombine.high %v57, %v57
    %v74 = vcombine.high %v58, %v58
    %v75 = vcombine.high %v59, %v59
    %v76 = vcombine.high %v60, %v60
    %v77 = vcombine.high %v61, %v61
    %v78 = vcombine.high %v62, %v62
    %v85 = vsel %vm66, %v57, 0.0
    %v86 = vsel %vm66, %v73, 0.0
    %v87 = vsel %vm66, %v58, 0.0
    %v88 = vsel %vm66, %v74, 0.0
    %v89 = vsel %vm66, %v59, 0.0
    %v90 = vsel %vm66, %v75, 0.0
    %v91 = vsel %vm66, %v60, 0.0
    %v92 = vsel %vm66, %v76, 0.0
    %v93 = vsel %vm66, %v61, 0.0
    %v94 = vsel %vm66, %v77, 0.0
    %v95 = vsel %vm66, %v62, 0.0
    %v96 = vsel %vm66, %v78, 0.0
    %vm97 = vcmask 1043456
    %v98 = vsel %vm97, %v85, 0.0
    %v99 = vrot.slane %v98, 4
    %v100 = vadd.f32 %v98, %v99
    %v101 = vrot.slane %v100, 2
    %v102 = vadd.f32 %v100, %v101
    %v103 = vrot.slane %v102, 1
    %v104 = vadd.f32 %v102, %v103
    %v105 = vsel %vm97, %v86, 0.0
    %v106 = vrot.slane %v105, 4
    %v107 = vadd.f32 %v105, %v106
    %v108 = vrot.slane %v107, 2
    %v109 = vadd.f32 %v107, %v108
    %v110 = vrot.slane %v109, 1
    %v111 = vadd.f32 %v109, %v110
    %v112 = vsel %vm97, %v87, 0.0
    %v113 = vrot.slane %v112, 4
    %v114 = vadd.f32 %v112, %v113
    %v115 = vrot.slane %v114, 2
    %v116 = vadd.f32 %v114, %v115
    %v117 = vrot.slane %v116, 1
    %v118 = vadd.f32 %v116, %v117
    %v119 = vsel %vm97, %v88, 0.0
    %v120 = vrot.slane %v119, 4
    %v121 = vadd.f32 %v119, %v120
    %v122 = vrot.slane %v121, 2
    %v123 = vadd.f32 %v121, %v122
    %v124 = vrot.slane %v123, 1
    %v125 = vadd.f32 %v123, %v124
    %v126 = vsel %vm97, %v89, 0.0
    %v127 = vrot.slane %v126, 4
    %v128 = vadd.f32 %v126, %v127
    %v129 = vrot.slane %v128, 2
    %v130 = vadd.f32 %v128, %v129
    %v131 = vrot.slane %v130, 1
    %v132 = vadd.f32 %v130, %v131
    %v133 = vsel %vm97, %v90, 0.0
    %v134 = vrot.slane %v133, 4
    %v135 = vadd.f32 %v133, %v134
    %v136 = vrot.slane %v135, 2
    %v137 = vadd.f32 %v135, %v136
    %v138 = vrot.slane %v137, 1
    %v139 = vadd.f32 %v137, %v138
    %v140 = vsel %vm97, %v91, 0.0
    %v141 = vrot.slane %v140, 4
    %v142 = vadd.f32 %v140, %v141
    %v143 = vrot.slane %v142, 2
    %v144 = vadd.f32 %v142, %v143
    %v145 = vrot.slane %v144, 1
    %v146 = vadd.f32 %v144, %v145
    %v147 = vsel %vm97, %v92, 0.0
    %v148 = vrot.slane %v147, 4
    %v149 = vadd.f32 %v147, %v148
    %v150 = vrot.slane %v149, 2
    %v151 = vadd.f32 %v149, %v150
    %v152 = vrot.slane %v151, 1
    %v153 = vadd.f32 %v151, %v152
    %v154 = vsel %vm97, %v93, 0.0
    %v155 = vrot.slane %v154, 4
    %v156 = vadd.f32 %v154, %v155
    %v157 = vrot.slane %v156, 2
    %v158 = vadd.f32 %v156, %v157
    %v159 = vrot.slane %v158, 1
    %v160 = vadd.f32 %v158, %v159
    %v161 = vsel %vm97, %v94, 0.0
    %v162 = vrot.slane %v161, 4
    %v163 = vadd.f32 %v161, %v162
    %v164 = vrot.slane %v163, 2
    %v165 = vadd.f32 %v163, %v164
    %v166 = vrot.slane %v165, 1
    %v167 = vadd.f32 %v165, %v166
    %v168 = vsel %vm97, %v95, 0.0
    %v169 = vrot.slane %v168, 4
    %v170 = vadd.f32 %v168, %v169
    %v171 = vrot.slane %v170, 2
    %v172 = vadd.f32 %v170, %v171
    %v173 = vrot.slane %v172, 1
    %v174 = vadd.f32 %v172, %v173
    %v175 = vsel %vm97, %v96, 0.0
    %v176 = vrot.slane %v175, 4
    %v177 = vadd.f32 %v175, %v176
    %v178 = vrot.slane %v177, 2
    %v179 = vadd.f32 %v177, %v178
    %v180 = vrot.slane %v179, 1
    %v181 = vadd.f32 %v179, %v180
    %v194 = vcombine.low %v104, %v111
    %v195 = vcombine.low %v118, %v125
    %v197 = vunpack.c.l.s4 1983009808
    %v198 = vunpack.c.0.s8 %v197
    %v199 = vlaneseq
    %v200 = vshrl.u32 %v199, 7
    %v201 = vsub.s32 %v198, %v200
    %v202 = vrot.slane %v194, %v201
    %v204 = vunpack.c.l.s4 1983009808
    %v205 = vunpack.c.0.s8 %v204
    %v206 = vlaneseq
    %v207 = vshrl.u32 %v206, 7
    %v208 = vsub.s32 %v205, %v207
    %v209 = vrot.slane %v195, %v208
    %v210 = vcombine.low %v202, %v209
    %v211 = vcombine.low %v132, %v139
    %v213 = vunpack.c.l.s4 1983009808
    %v214 = vunpack.c.0.s8 %v213
    %v215 = vlaneseq
    %v216 = vshrl.u32 %v215, 7
    %v217 = vsub.s32 %v214, %v216
    %v218 = vrot.slane %v211, %v217
    %v219 = vcombine.low %v146, %v153
    %v220 = vcombine.low %v160, %v167
    %v222 = vunpack.c.l.s4 1983009808
    %v223 = vunpack.c.0.s8 %v222
    %v224 = vlaneseq
    %v225 = vshrl.u32 %v224, 7
    %v226 = vsub.s32 %v223, %v225
    %v227 = vrot.slane %v219, %v226
    %v229 = vunpack.c.l.s4 1983009808
    %v230 = vunpack.c.0.s8 %v229
    %v231 = vlaneseq
    %v232 = vshrl.u32 %v231, 7
    %v233 = vsub.s32 %v230, %v232
    %v234 = vrot.slane %v220, %v233
    %v235 = vcombine.low %v227, %v234
    %v236 = vcombine.low %v174, %v181
    %v238 = vunpack.c.l.s4 1983009808
    %v239 = vunpack.c.0.s8 %v238
    %v240 = vlaneseq
    %v241 = vshrl.u32 %v240, 7
    %v242 = vsub.s32 %v239, %v241
    %v243 = vrot.slane %v236, %v242
    %vm244 = vcmask 1044484
    %v245 = vsel %vm244, %v210, %v210
    %vm246 = vcmask 1046534
    %v247 = vsel %vm246, %v210, %v245
    %v248 = vrot.slane %v235, 7
    %vm249 = vcmask 1041409
    %v250 = vsel %vm249, %v248, %v247
    %vm251 = vcmask 1043459
    %v252 = vsel %vm251, %v248, %v250
    %vm253 = vcmask 1045509
    %v254 = vsel %vm253, %v248, %v252
    %vm255 = vcmask 1047559
    %v256 = vsel %vm255, %v248, %v254
    %v257 = vsel %vm244, %v218, %v218
    %v258 = vsel %vm246, %v218, %v257
    %v259 = vrot.slane %v243, 7
    %v260 = vsel %vm249, %v259, %v258
    %v261 = vsel %vm251, %v259, %v260
    %v262 = vsel %vm253, %v259, %v261
    %v263 = vsel %vm255, %v259, %v262
    %v266 = vadd.f32 %v63, %v256
    %v267 = vadd.f32 %v64, %v263
    %268 = vst [vmem:[#allocation2] sm:$0xff] %v266
    %269 = vst [vmem:[#allocation2 + $0x8] sm:$0xf] %v267
    // Predicated region
    $region26: #{tpu_custom_call.1} parent=1 // pred_check
      %p270 = pneg %p43
    $region27: #{tpu_custom_call.1} parent=1 // pred_check_branch
      %272 = sbr.rel (%p270) target = $region29
    $region28: #{tpu_custom_call.1} parent=1 // pred_region
      %v273 = vld [vmem:[#allocation2] sm:$0xff]
      %v274 = vld [vmem:[#allocation2 + $0x8] sm:$0xf]
      %v275 = vld [vmem:[#allocation6] sm:$0xff]
      %v276 = vld [vmem:[#allocation6 + $0x8] sm:$0xff]
      %v277 = vld [vmem:[#allocation6 + $0x10] sm:$0xff]
      %v278 = vld [vmem:[#allocation6 + $0x18] sm:$0xff]
      %v279 = vld [vmem:[#allocation6 + $0x20] sm:$0xff]
      %v280 = vld [vmem:[#allocation6 + $0x28] sm:$0xff]
      %v281 = vld [vmem:[#allocation6 + $0x30] sm:$0xff]
      %v282 = vld [vmem:[#allocation6 + $0x38] sm:$0xff]
      %v283 = vld [vmem:[#allocation6 + $0x40] sm:$0xff]
      %v284 = vld [vmem:[#allocation6 + $0x48] sm:$0xff]
      %v285 = vld [vmem:[#allocation6 + $0x50] sm:$0xff]
      %v286 = vld [vmem:[#allocation6 + $0x58] sm:$0xff]
      %v287 = vld [vmem:[#allocation6 + $0x60] sm:$0xff]
      %v288 = vld [vmem:[#allocation6 + $0x68] sm:$0xff]
      %v289 = vld [vmem:[#allocation6 + $0x70] sm:$0xff]
      %v290 = vld [vmem:[#allocation6 + $0x78] sm:$0xff]
      %v291 = vld [vmem:[#allocation6 + $0x80] sm:$0xff]
      %v292 = vld [vmem:[#allocation6 + $0x88] sm:$0xff]
      %v293 = vld [vmem:[#allocation6 + $0x90] sm:$0xff]
      %v294 = vld [vmem:[#allocation6 + $0x98] sm:$0xff]
      %v295 = vld [vmem:[#allocation6 + $0xa0] sm:$0xff]
      %v296 = vld [vmem:[#allocation6 + $0xa8] sm:$0xff]
      %v297 = vld [vmem:[#allocation6 + $0xb0] sm:$0xff]
      %v298 = vld [vmem:[#allocation6 + $0xb8] sm:$0xff]
      %v299 = vld [vmem:[#allocation6 + $0xc0] sm:$0xff]
      %v300 = vld [vmem:[#allocation6 + $0xc8] sm:$0xff]
      %v301 = vld [vmem:[#allocation6 + $0xd0] sm:$0xff]
      %v302 = vld [vmem:[#allocation6 + $0xd8] sm:$0xff]
      %v303 = vld [vmem:[#allocation6 + $0xe0] sm:$0xff]
      %v304 = vld [vmem:[#allocation6 + $0xe8] sm:$0xff]
      %v305 = vld [vmem:[#allocation6 + $0xf0] sm:$0xff]
      %v306 = vld [vmem:[#allocation6 + $0xf8] sm:$0xff]
      %v307 = vld [vmem:[#allocation6 + $0x100] sm:$0xff]
      %v308 = vld [vmem:[#allocation6 + $0x108] sm:$0xff]
      %v309 = vld [vmem:[#allocation6 + $0x110] sm:$0xff]
      %v310 = vld [vmem:[#allocation6 + $0x118] sm:$0xff]
      %v311 = vld [vmem:[#allocation6 + $0x120] sm:$0xff]
      %v312 = vld [vmem:[#allocation6 + $0x128] sm:$0xff]
      %v313 = vld [vmem:[#allocation6 + $0x130] sm:$0xff]
      %v314 = vld [vmem:[#allocation6 + $0x138] sm:$0xff]
      %v315 = vld [vmem:[#allocation6 + $0x140] sm:$0xff]
      %v316 = vld [vmem:[#allocation6 + $0x148] sm:$0xff]
      %v317 = vld [vmem:[#allocation6 + $0x150] sm:$0xff]
      %v318 = vld [vmem:[#allocation6 + $0x158] sm:$0xff]
      %v319 = vld [vmem:[#allocation6 + $0x160] sm:$0xff]
      %v320 = vld [vmem:[#allocation6 + $0x168] sm:$0xff]
      %v321 = vld [vmem:[#allocation6 + $0x170] sm:$0xff]
      %v322 = vld [vmem:[#allocation6 + $0x178] sm:$0xff]
      %v323 = vld [vmem:[#allocation6 + $0x180] sm:$0xff]
      %v324 = vld [vmem:[#allocation6 + $0x188] sm:$0xff]
      %v325 = vld [vmem:[#allocation6 + $0x190] sm:$0xff]
      %v326 = vld [vmem:[#allocation6 + $0x198] sm:$0xff]
      %v327 = vld [vmem:[#allocation6 + $0x1a0] sm:$0xff]
      %v328 = vld [vmem:[#allocation6 + $0x1a8] sm:$0xff]
      %v329 = vld [vmem:[#allocation6 + $0x1b0] sm:$0xff]
      %v330 = vld [vmem:[#allocation6 + $0x1b8] sm:$0xff]
      %v331 = vld [vmem:[#allocation6 + $0x1c0] sm:$0xff]
      %v332 = vld [vmem:[#allocation6 + $0x1c8] sm:$0xff]
      %v333 = vld [vmem:[#allocation6 + $0x1d0] sm:$0xff]
      %v334 = vld [vmem:[#allocation6 + $0x1d8] sm:$0xff]
      %v335 = vld [vmem:[#allocation6 + $0x1e0] sm:$0xff]
      %v336 = vld [vmem:[#allocation6 + $0x1e8] sm:$0xff]
      %v337 = vld [vmem:[#allocation6 + $0x1f0] sm:$0xff]
      %v338 = vld [vmem:[#allocation6 + $0x1f8] sm:$0xff]
      %v339 = vld [vmem:[#allocation6 + $0x200] sm:$0xff]
      %v340 = vld [vmem:[#allocation6 + $0x208] sm:$0xff]
      %v341 = vld [vmem:[#allocation6 + $0x210] sm:$0xff]
      %v342 = vld [vmem:[#allocation6 + $0x218] sm:$0xff]
      %v343 = vld [vmem:[#allocation6 + $0x220] sm:$0xff]
      %v344 = vld [vmem:[#allocation6 + $0x228] sm:$0xff]
      %v345 = vld [vmem:[#allocation6 + $0x230] sm:$0xff]
      %v346 = vld [vmem:[#allocation6 + $0x238] sm:$0xff]
      %v347 = vld [vmem:[#allocation6 + $0x240] sm:$0xff]
      %v348 = vld [vmem:[#allocation6 + $0x248] sm:$0xff]
      %v349 = vld [vmem:[#allocation6 + $0x250] sm:$0xff]
      %v350 = vld [vmem:[#allocation6 + $0x258] sm:$0xff]
      %v351 = vld [vmem:[#allocation6 + $0x260] sm:$0xff]
      %v352 = vld [vmem:[#allocation6 + $0x268] sm:$0xff]
      %v353 = vld [vmem:[#allocation6 + $0x270] sm:$0xff]
      %v354 = vld [vmem:[#allocation6 + $0x278] sm:$0xff]
      %v355 = vld [vmem:[#allocation6 + $0x280] sm:$0xff]
      %v356 = vld [vmem:[#allocation6 + $0x288] sm:$0xff]
      %v357 = vld [vmem:[#allocation6 + $0x290] sm:$0xff]
      %v358 = vld [vmem:[#allocation6 + $0x298] sm:$0xff]
      %v359 = vld [vmem:[#allocation6 + $0x2a0] sm:$0xff]
      %v360 = vld [vmem:[#allocation6 + $0x2a8] sm:$0xff]
      %v361 = vld [vmem:[#allocation6 + $0x2b0] sm:$0xff]
      %v362 = vld [vmem:[#allocation6 + $0x2b8] sm:$0xff]
      %v363 = vld [vmem:[#allocation6 + $0x2c0] sm:$0xff]
      %v364 = vld [vmem:[#allocation6 + $0x2c8] sm:$0xff]
      %v365 = vld [vmem:[#allocation6 + $0x2d0] sm:$0xff]
      %v366 = vld [vmem:[#allocation6 + $0x2d8] sm:$0xff]
      %v367 = vld [vmem:[#allocation6 + $0x2e0] sm:$0xff]
      %v368 = vld [vmem:[#allocation6 + $0x2e8] sm:$0xff]
      %v369 = vld [vmem:[#allocation6 + $0x2f0] sm:$0xff]
      %v370 = vld [vmem:[#allocation6 + $0x2f8] sm:$0xff]
      %v371 = vld [vmem:[%s2] sm:$0x1]
      %v373 = vlaneseq
      %v374 = vshrl.u32 %v373, 7
      %v375 = vsub.s32 0, %v374
      %v376 = vrot.slane %v371, %v375
      %v380 = vcombine.high %v273, %v273
      %v382 = vunpack.c.l.s4 1983009808
      %v383 = vunpack.c.0.s8 %v382
      %v384 = vlaneseq
      %v385 = vshrl.u32 %v384, 7
      %v386 = vsub.s32 %v383, %v385
      %v387 = vrot.slane %v273, %v386
      %v389 = vunpack.c.l.s4 1983009808
      %v390 = vunpack.c.0.s8 %v389
      %v391 = vlaneseq
      %v392 = vshrl.u32 %v391, 7
      %v393 = vsub.s32 %v390, %v392
      %v394 = vrot.slane %v380, %v393
      %v395 = vcombine.high %v387, %v387
      %v396 = vcombine.high %v394, %v394
      %v398 = vunpack.c.l.s4 1983009808
      %v399 = vunpack.c.0.s8 %v398
      %v400 = vlaneseq
      %v401 = vshrl.u32 %v400, 7
      %v402 = vsub.s32 %v399, %v401
      %v403 = vrot.slane %v274, %v402
      %v404 = vcombine.high %v403, %v403
      %411 = vmatprep.subr.mxu0 0.0
      %412 = vmatpush1.msra.mxu0 %v290
      %413 = vmatprep.subr.mxu0 0.0
      %414 = vmatpush1.msra.mxu0 %v289
      %415 = vmatprep.subr.mxu0 0.0
      %416 = vmatpush1.msra.mxu0 %v288
      %417 = vmatprep.subr.mxu0 0.0
      %418 = vmatpush1.msra.mxu0 %v287
      %419 = vmatprep.subr.mxu0 0.0
      %420 = vmatpush1.msra.mxu0 %v286
      %421 = vmatprep.subr.mxu0 0.0
      %422 = vmatpush1.msra.mxu0 %v285
      %423 = vmatprep.subr.mxu0 0.0
      %424 = vmatpush1.msra.mxu0 %v284
      %425 = vmatprep.subr.mxu0 0.0
      %426 = vmatpush1.msra.mxu0 %v283
      %427 = vmatprep.subr.mxu0 0.0
      %428 = vmatpush1.msra.mxu0 %v282
      %429 = vmatprep.subr.mxu0 0.0
      %430 = vmatpush1.msra.mxu0 %v281
      %431 = vmatprep.subr.mxu0 0.0
      %432 = vmatpush1.msra.mxu0 %v280
      %433 = vmatprep.subr.mxu0 0.0
      %434 = vmatpush1.msra.mxu0 %v279
      %435 = vmatprep.subr.mxu0 0.0
      %436 = vmatpush1.msra.mxu0 %v278
      %437 = vmatprep.subr.mxu0 0.0
      %438 = vmatpush1.msra.mxu0 %v277
      %439 = vmatprep.subr.mxu0 0.0
      %440 = vmatpush1.msra.mxu0 %v276
      %441 = vmatprep.subr.mxu0 0.0
      %442 = vmatpush1.msra.mxu0 %v275
      %443 = vmatprep.subr.mxu0 0.0
      %444 = vmatpush2.msra.mxu0 %v306
      %445 = vmatprep.subr.mxu0 0.0
      %446 = vmatpush2.msra.mxu0 %v305
      %447 = vmatprep.subr.mxu0 0.0
      %448 = vmatpush2.msra.mxu0 %v304
      %449 = vmatprep.subr.mxu0 0.0
      %450 = vmatpush2.msra.mxu0 %v303
      %451 = vmatprep.subr.mxu0 0.0
      %452 = vmatpush2.msra.mxu0 %v302
      %453 = vmatprep.subr.mxu0 0.0
      %454 = vmatpush2.msra.mxu0 %v301
      %455 = vmatprep.subr.mxu0 0.0
      %456 = vmatpush2.msra.mxu0 %v300
      %457 = vmatprep.subr.mxu0 0.0
      %458 = vmatpush2.msra.mxu0 %v299
      %459 = vmatprep.subr.mxu0 0.0
      %460 = vmatpush2.msra.mxu0 %v298
      %461 = vmatprep.subr.mxu0 0.0
      %462 = vmatpush2.msra.mxu0 %v297
      %463 = vmatprep.subr.mxu0 0.0
      %464 = vmatpush2.msra.mxu0 %v296
      %465 = vmatprep.subr.mxu0 0.0
      %466 = vmatpush2.msra.mxu0 %v295
      %467 = vmatprep.subr.mxu0 0.0
      %468 = vmatpush2.msra.mxu0 %v294
      %469 = vmatprep.subr.mxu0 0.0
      %470 = vmatpush2.msra.mxu0 %v293
      %471 = vmatprep.subr.mxu0 0.0
      %472 = vmatpush2.msra.mxu0 %v292
      %473 = vmatprep.subr.mxu0 0.0
      %474 = vmatpush2.msra.mxu0 %v291
      %475 = vmatprep.mubr.f32.mxu0 %v395
      %476 = vmatmul.mubr.f32.gmra.mxu0 %v387
      %v477 = vpop.f32.mrf.mxu0
      %v478 = vadd.f32 %v376, %v477
      %v479 = vpop.f32.mrf.mxu0
      %480 = vdwg.mxu0
      %481 = vmatprep.subr.mxu0 0.0
      %482 = vmatpush1.msra.mxu0 %v322
      %483 = vmatprep.subr.mxu0 0.0
      %484 = vmatpush1.msra.mxu0 %v321
      %485 = vmatprep.subr.mxu0 0.0
      %486 = vmatpush1.msra.mxu0 %v320
      %487 = vmatprep.subr.mxu0 0.0
      %488 = vmatpush1.msra.mxu0 %v319
      %489 = vmatprep.subr.mxu0 0.0
      %490 = vmatpush1.msra.mxu0 %v318
      %491 = vmatprep.subr.mxu0 0.0
      %492 = vmatpush1.msra.mxu0 %v317
      %493 = vmatprep.subr.mxu0 0.0
      %494 = vmatpush1.msra.mxu0 %v316
      %495 = vmatprep.subr.mxu0 0.0
      %496 = vmatpush1.msra.mxu0 %v315
      %497 = vmatprep.subr.mxu0 0.0
      %498 = vmatpush1.msra.mxu0 %v314
      %499 = vmatprep.subr.mxu0 0.0
      %500 = vmatpush1.msra.mxu0 %v313
      %501 = vmatprep.subr.mxu0 0.0
      %502 = vmatpush1.msra.mxu0 %v312
      %503 = vmatprep.subr.mxu0 0.0
      %504 = vmatpush1.msra.mxu0 %v311
      %505 = vmatprep.subr.mxu0 0.0
      %506 = vmatpush1.msra.mxu0 %v310
      %507 = vmatprep.subr.mxu0 0.0
      %508 = vmatpush1.msra.mxu0 %v309
      %509 = vmatprep.subr.mxu0 0.0
      %510 = vmatpush1.msra.mxu0 %v308
      %511 = vmatprep.subr.mxu0 0.0
      %512 = vmatpush1.msra.mxu0 %v307
      %513 = vmatprep.subr.mxu0 0.0
      %514 = vmatpush2.msra.mxu0 %v338
      %515 = vmatprep.subr.mxu0 0.0
      %516 = vmatpush2.msra.mxu0 %v337
      %517 = vmatprep.subr.mxu0 0.0
      %518 = vmatpush2.msra.mxu0 %v336
      %519 = vmatprep.subr.mxu0 0.0
      %520 = vmatpush2.msra.mxu0 %v335
      %521 = vmatprep.subr.mxu0 0.0
      %522 = vmatpush2.msra.mxu0 %v334
      %523 = vmatprep.subr.mxu0 0.0
      %524 = vmatpush2.msra.mxu0 %v333
      %525 = vmatprep.subr.mxu0 0.0
      %526 = vmatpush2.msra.mxu0 %v332
      %527 = vmatprep.subr.mxu0 0.0
      %528 = vmatpush2.msra.mxu0 %v331
      %529 = vmatprep.subr.mxu0 0.0
      %530 = vmatpush2.msra.mxu0 %v330
      %531 = vmatprep.subr.mxu0 0.0
      %532 = vmatpush2.msra.mxu0 %v329
      %533 = vmatprep.subr.mxu0 0.0
      %534 = vmatpush2.msra.mxu0 %v328
      %535 = vmatprep.subr.mxu0 0.0
      %536 = vmatpush2.msra.mxu0 %v327
      %537 = vmatprep.subr.mxu0 0.0
      %538 = vmatpush2.msra.mxu0 %v326
      %539 = vmatprep.subr.mxu0 0.0
      %540 = vmatpush2.msra.mxu0 %v325
      %541 = vmatprep.subr.mxu0 0.0
      %542 = vmatpush2.msra.mxu0 %v324
      %543 = vmatprep.subr.mxu0 0.0
      %544 = vmatpush2.msra.mxu0 %v323
      %545 = vmatprep.mubr.f32.mxu0 %v396
      %546 = vmatmul.mubr.f32.gmra.mxu0 %v394
      %v547 = vpop.f32.mrf.mxu0
      %v548 = vadd.f32 %v478, %v547
      %v549 = vpop.f32.mrf.mxu0
      %550 = vdwg.mxu0
      %551 = vmatprep.subr.mxu0 0.0
      %552 = vmatpush1.msra.mxu0 %v354
      %553 = vmatprep.subr.mxu0 0.0
      %554 = vmatpush1.msra.mxu0 %v353
      %555 = vmatprep.subr.mxu0 0.0
      %556 = vmatpush1.msra.mxu0 %v352
      %557 = vmatprep.subr.mxu0 0.0
      %558 = vmatpush1.msra.mxu0 %v351
      %559 = vmatprep.subr.mxu0 0.0
      %560 = vmatpush1.msra.mxu0 %v350
      %561 = vmatprep.subr.mxu0 0.0
      %562 = vmatpush1.msra.mxu0 %v349
      %563 = vmatprep.subr.mxu0 0.0
      %564 = vmatpush1.msra.mxu0 %v348
      %565 = vmatprep.subr.mxu0 0.0
      %566 = vmatpush1.msra.mxu0 %v347
      %567 = vmatprep.subr.mxu0 0.0
      %568 = vmatpush1.msra.mxu0 %v346
      %569 = vmatprep.subr.mxu0 0.0
      %570 = vmatpush1.msra.mxu0 %v345
      %571 = vmatprep.subr.mxu0 0.0
      %572 = vmatpush1.msra.mxu0 %v344
      %573 = vmatprep.subr.mxu0 0.0
      %574 = vmatpush1.msra.mxu0 %v343
      %575 = vmatprep.subr.mxu0 0.0
      %576 = vmatpush1.msra.mxu0 %v342
      %577 = vmatprep.subr.mxu0 0.0
      %578 = vmatpush1.msra.mxu0 %v341
      %579 = vmatprep.subr.mxu0 0.0
      %580 = vmatpush1.msra.mxu0 %v340
      %581 = vmatprep.subr.mxu0 0.0
      %582 = vmatpush1.msra.mxu0 %v339
      %583 = vmatprep.subr.mxu0 0.0
      %584 = vmatpush2.msra.mxu0 %v370
      %585 = vmatprep.subr.mxu0 0.0
      %586 = vmatpush2.msra.mxu0 %v369
      %587 = vmatprep.subr.mxu0 0.0
      %588 = vmatpush2.msra.mxu0 %v368
      %589 = vmatprep.subr.mxu0 0.0
      %590 = vmatpush2.msra.mxu0 %v367
      %591 = vmatprep.subr.mxu0 0.0
      %592 = vmatpush2.msra.mxu0 %v366
      %593 = vmatprep.subr.mxu0 0.0
      %594 = vmatpush2.msra.mxu0 %v365
      %595 = vmatprep.subr.mxu0 0.0
      %596 = vmatpush2.msra.mxu0 %v364
      %597 = vmatprep.subr.mxu0 0.0
      %598 = vmatpush2.msra.mxu0 %v363
      %599 = vmatprep.subr.mxu0 0.0
      %600 = vmatpush2.msra.mxu0 %v362
      %601 = vmatprep.subr.mxu0 0.0
      %602 = vmatpush2.msra.mxu0 %v361
      %603 = vmatprep.subr.mxu0 0.0
      %604 = vmatpush2.msra.mxu0 %v360
      %605 = vmatprep.subr.mxu0 0.0
      %606 = vmatpush2.msra.mxu0 %v359
      %607 = vmatprep.subr.mxu0 0.0
      %608 = vmatpush2.msra.mxu0 %v358
      %609 = vmatprep.subr.mxu0 0.0
      %610 = vmatpush2.msra.mxu0 %v357
      %611 = vmatprep.subr.mxu0 0.0
      %612 = vmatpush2.msra.mxu0 %v356
      %613 = vmatprep.subr.mxu0 0.0
      %614 = vmatpush2.msra.mxu0 %v355
      %615 = vmatprep.mubr.f32.mxu0 %v404
      %616 = vmatmul.mubr.f32.gmra.mxu0 %v403
      %v617 = vpop.f32.mrf.mxu0
      %v618 = vadd.f32 %v548, %v617
      %v619 = vpop.f32.mrf.mxu0
      %620 = vdwg.mxu0
      %621 = vst [vmem:[#allocation8] sm:$0x3] %v618
    $region29: #{tpu_custom_call.1} parent=1 // pred_fallthru
      _
    // Predicated region
    $region30: #{tpu_custom_call.1} parent=1 // pred_check
      _
    $region31: #{tpu_custom_call.1} parent=1 // pred_check_branch
      %623 = sbr.rel (0) target = $region33
    $region32: #{tpu_custom_call.1} parent=1 // pred_region
      %s625 = ssub.s32 32, 32
      %626 = vsyncadd [#allocation5], %s625
      %s628 = sshll.u32 [#allocation8], 4
      %s629 = int_to_ptr.vmem [resolvable:$true] %s628
      %631 = dma.vmem_to_hbm [thread:$0]  %s629, 32, %s3, [#allocation5]
    $region33: #{tpu_custom_call.1} parent=1 // pred_fallthru
      _
    // Predicated region
    $region34: #{tpu_custom_call.1} parent=1 // pred_check
      _
    $region35: #{tpu_custom_call.1} parent=1 // pred_check_branch
      %633 = sbr.rel (0) target = $region37
    $region36: #{tpu_custom_call.1} parent=1 // pred_region
      %634 = dma.done [#allocation5], 32
    $region37: #{tpu_custom_call.1} parent=1 // pred_fallthru
      _
    %635 = vsyncpa [#allocation4], 1
    %636 = vsyncpa [#allocation7], 1
    %637 = vsyncpa [#allocation5], 1

</llo_original>
